<compile_context>
chip_gen: v5e
topology: v5e:2x2
jax: 0.10.0
libtpu: 0.0.40
codegen_flags: <defaults>
</compile_context>

<pallas_src>
import functools

import jax
import jax.numpy as jnp
from jax.experimental import pallas as pl
from jax.experimental.pallas import tpu as pltpu


def _round_up(x, m):
    return ((x + m - 1) // m) * m


def _iterative_kernel_bias(x_ref, weff_ref, b_ref, o_ref, *, n_iter):
    """x tile (TB, Fp), resident W_eff (Fp, Fp), bias (1, Fp)."""
    w_eff = weff_ref[...].astype(jnp.float32)
    bias = b_ref[...].astype(jnp.float32)            # (1, Fp) broadcasts over rows
    x = x_ref[...].astype(jnp.float32)
    for _ in range(n_iter):                          # static unroll (compile-time n_iter)
        x = jnp.dot(x, w_eff, preferred_element_type=jnp.float32) + bias
    o_ref[...] = x.astype(o_ref.dtype)


def _iterative_kernel_nobias(x_ref, weff_ref, o_ref, *, n_iter):
    w_eff = weff_ref[...].astype(jnp.float32)
    x = x_ref[...].astype(jnp.float32)
    for _ in range(n_iter):                          # static unroll
        x = jnp.dot(x, w_eff, preferred_element_type=jnp.float32)
    o_ref[...] = x.astype(o_ref.dtype)


def _choose_tile_b(B, F_pad, budget_bytes):
    """Largest batch tile (multiple of 8) whose double-buffered in+out tiles plus
    resident f32 weights fit the VMEM budget."""
    resident = F_pad * F_pad * 4 + F_pad * 4          # W_eff + bias (f32)
    tile = 256
    while tile > 8 and resident + 4 * tile * F_pad * 4 > budget_bytes:
        tile //= 2
    tile = max(tile, 8)
    b_aligned = max(8, _round_up(B, 8))
    return min(tile, b_aligned)


def iterative_forward(x, weight, bias, *, n_iter, linear):
    """x: (B, F), weight: (F, F), bias: (F,) or None."""
    B, F = x.shape
    assert weight.shape == (F, F), "Weight matrix must be square and match features"
    use_bias = bias is not None

    # ---- fold the iteration matrix once, in the wrapper (hoisted off the MXU loop) --
    F_pad = _round_up(F, 128)
    pad_f = F_pad - F
    w_pad = jnp.pad(weight.astype(jnp.float32), ((0, pad_f), (0, pad_f)))
    w_eff = jnp.dot(w_pad, w_pad, preferred_element_type=jnp.float32)
    if linear:
        w_eff = w_eff + w_pad                         # x@(W@W) + x@W == x@(W@W + W)
    w_eff = w_eff.astype(x.dtype)

    # ---- lane-dense padding of the streamed operand -------------------------------
    tile_b = _choose_tile_b(B, F_pad, budget_bytes=40 * 1024 * 1024)
    B_pad = _round_up(B, tile_b)
    x_pad = jnp.pad(x, ((0, B_pad - B), (0, pad_f)))

    grid = (B_pad // tile_b,)
    x_spec = pl.BlockSpec((tile_b, F_pad), lambda i: (i, 0))
    w_spec = pl.BlockSpec((F_pad, F_pad), lambda i: (0, 0))   # resident across grid
    out_spec = pl.BlockSpec((tile_b, F_pad), lambda i: (i, 0))

    cparams = pltpu.CompilerParams(
        dimension_semantics=("parallel",),            # megacore sharding on v7x
        vmem_limit_bytes=64 * 1024 * 1024,
    )

    if use_bias:
        b_pad = jnp.pad(bias.astype(x.dtype), (0, pad_f)).reshape(1, F_pad)
        kernel = functools.partial(_iterative_kernel_bias, n_iter=n_iter)
        out = pl.pallas_call(
            kernel,
            out_shape=jax.ShapeDtypeStruct((B_pad, F_pad), x.dtype),
            grid=grid,
            in_specs=[x_spec, w_spec, pl.BlockSpec((1, F_pad), lambda i: (0, 0))],
            out_specs=out_spec,
            compiler_params=cparams,
        )(x_pad, w_eff, b_pad)
    else:
        kernel = functools.partial(_iterative_kernel_nobias, n_iter=n_iter)
        out = pl.pallas_call(
            kernel,
            out_shape=jax.ShapeDtypeStruct((B_pad, F_pad), x.dtype),
            grid=grid,
            in_specs=[x_spec, w_spec],
            out_specs=out_spec,
            compiler_params=cparams,
        )(x_pad, w_eff)

    return out[:B, :F]


def iterative_reference(x, weight, bias, *, n_iter, linear):
    """Pure-JAX reference mirroring the PyTorch autograd.Function forward."""
    w2 = weight @ weight
    for _ in range(n_iter):
        out = x @ w2
        if linear:
            out = out + x @ weight
        if bias is not None:
            out = out + bias[None, :]
        x = out
    return x


if __name__ == "__main__":
    # Module config: input_features == output_features (square weight required).
    B, F = 8, 32
    n_iter = 3

    key = jax.random.PRNGKey(0)
    kx, kw, kb = jax.random.split(key, 3)

    x = jax.random.normal(kx, (B, F), dtype=jnp.float32)
    # Matches nn.Parameter(...).uniform_(-0.1, 0.1) scale.
    weight = jax.random.uniform(kw, (F, F), dtype=jnp.float32, minval=-0.1, maxval=0.1)
    bias = jax.random.uniform(kb, (F,), dtype=jnp.float32, minval=-0.1, maxval=0.1)

    ok = True
    for linear in (True, False):
        for b in (bias, None):
            out = jax.block_until_ready(
                iterative_forward(x, weight, b, n_iter=n_iter, linear=linear))
            ref = iterative_reference(x, weight, b, n_iter=n_iter, linear=linear)
            assert out.shape == (B, F)
            if not jnp.allclose(out, ref, atol=1e-4, rtol=1e-4):
                ok = False

    assert ok, "mismatch vs reference"
    print("KERNEL_OK")
</pallas_src>

<mosaic_0001>
module attributes {stable_mosaic.version = 11 : i64} {
  func.func @_iterative_kernel_bias(%arg0: i32, %arg1: memref<8x128xf32, #tpu.memory_space<vmem>>, %arg2: memref<128x128xf32, #tpu.memory_space<vmem>>, %arg3: memref<1x128xf32, #tpu.memory_space<vmem>>, %arg4: memref<8x128xf32, #tpu.memory_space<vmem>>) attributes {dimension_semantics = [#tpu.dimension_semantics<parallel>], iteration_bounds = array<i64: 1>, scalar_prefetch = 0 : i64, scratch_operands = 0 : i64, tpu.core_type = #tpu.core_type<tc>, window_params = [{transform_indices = @transform_0, window_bounds = array<i64: 8, 128>}, {pipeline_mode = #tpu.pipeline_mode<synchronous>, transform_indices = @transform_1, window_bounds = array<i64: 128, 128>}, {pipeline_mode = #tpu.pipeline_mode<synchronous>, transform_indices = @transform_2, window_bounds = array<i64: 1, 128>}, {transform_indices = @transform_3, window_bounds = array<i64: 8, 128>}]} {
    %c0 = arith.constant 0 : index
    %c0_0 = arith.constant 0 : index
    %0 = vector.load %arg2[%c0, %c0_0] : memref<128x128xf32, #tpu.memory_space<vmem>>, vector<128x128xf32>
    %c0_1 = arith.constant 0 : index
    %c0_2 = arith.constant 0 : index
    %1 = vector.load %arg3[%c0_1, %c0_2] : memref<1x128xf32, #tpu.memory_space<vmem>>, vector<1x128xf32>
    %c0_3 = arith.constant 0 : index
    %c0_4 = arith.constant 0 : index
    %2 = vector.load %arg1[%c0_3, %c0_4] : memref<8x128xf32, #tpu.memory_space<vmem>>, vector<8x128xf32>
    %cst = arith.constant dense<0.000000e+00> : vector<8x128xf32>
    %3 = tpu.matmul %2, %0, %cst {dimension_numbers = #tpu.dot_dimension_numbers<[1], [0], [0], [1], [0, 0, 1, 1], [], []>} : vector<8x128xf32>, vector<128x128xf32>, vector<8x128xf32> -> vector<8x128xf32>
    %4 = vector.broadcast %1 : vector<1x128xf32> to vector<8x128xf32>
    %5 = arith.addf %3, %4 : vector<8x128xf32>
    %cst_5 = arith.constant dense<0.000000e+00> : vector<8x128xf32>
    %6 = tpu.matmul %5, %0, %cst_5 {dimension_numbers = #tpu.dot_dimension_numbers<[1], [0], [0], [1], [0, 0, 1, 1], [], []>} : vector<8x128xf32>, vector<128x128xf32>, vector<8x128xf32> -> vector<8x128xf32>
    %7 = vector.broadcast %1 : vector<1x128xf32> to vector<8x128xf32>
    %8 = arith.addf %6, %7 : vector<8x128xf32>
    %cst_6 = arith.constant dense<0.000000e+00> : vector<8x128xf32>
    %9 = tpu.matmul %8, %0, %cst_6 {dimension_numbers = #tpu.dot_dimension_numbers<[1], [0], [0], [1], [0, 0, 1, 1], [], []>} : vector<8x128xf32>, vector<128x128xf32>, vector<8x128xf32> -> vector<8x128xf32>
    %10 = vector.broadcast %1 : vector<1x128xf32> to vector<8x128xf32>
    %11 = arith.addf %9, %10 : vector<8x128xf32>
    %c0_7 = arith.constant 0 : index
    %c0_8 = arith.constant 0 : index
    %12 = vector.load %arg4[%c0_7, %c0_8] : memref<8x128xf32, #tpu.memory_space<vmem>>, vector<8x128xf32>
    tpu.vector_store %arg4[%c0_7, %c0_8], %11 {strides = array<i32>} : memref<8x128xf32, #tpu.memory_space<vmem>>, vector<8x128xf32>,
    return
  }
  func.func @transform_0(%arg0: i32) -> (i32, i32) {
    %c0_i32 = arith.constant 0 : i32
    %c0_i32_0 = arith.constant 0 : i32
    return %arg0, %c0_i32 : i32, i32
  }
  func.func @transform_1(%arg0: i32) -> (i32, i32) {
    %c0_i32 = arith.constant 0 : i32
    %c0_i32_0 = arith.constant 0 : i32
    %c0_i32_1 = arith.constant 0 : i32
    return %c0_i32, %c0_i32_0 : i32, i32
  }
  func.func @transform_2(%arg0: i32) -> (i32, i32) {
    %c0_i32 = arith.constant 0 : i32
    %c0_i32_0 = arith.constant 0 : i32
    %c0_i32_1 = arith.constant 0 : i32
    return %c0_i32, %c0_i32_0 : i32, i32
  }
  func.func @transform_3(%arg0: i32) -> (i32, i32) {
    %c0_i32 = arith.constant 0 : i32
    %c0_i32_0 = arith.constant 0 : i32
    return %arg0, %c0_i32 : i32, i32
  }
}

</mosaic_0001>

<llo_original>
// kernel: tpu_custom_call.1
$region0: #{tpu_custom_call.1}
  #allocation0 [shape = 'u32[]', space=smem, size = 0x4, offset = 0x4, fixed_abs, tag = 'smem constant byte address 0x4 - core index']
  #allocation1 [shape = 'u32[72,128]{1,0:T(1,128)}', space=vmem, size = 0x9000, scoped, tag = 'internal scratch']
  %s0 = inlined_call_operand.hbm [shape: f32[8,128], index: 0, kind: input, shape index: {}]
  %s1 = inlined_call_operand.hbm [shape: f32[128,128], index: 1, kind: input, shape index: {}]
  %s2 = inlined_call_operand.vmem [shape: f32[1,128], index: 2, kind: input, shape index: {}]
  %s3 = inlined_call_operand.hbm [shape: f32[8,128], index: 3, kind: output, shape index: {}]
  %s4 = sld [smem:[#allocation0]]
  $region30: #{tpu_custom_call.1} parent=0
    _
  %s6 = ssub.s32 1, %s4
  %s7 = scalar_select 0, %s6, %s4
  $region1: #{tpu_custom_call.1} parent=0
    #allocation2 [shape = 'u8[4096]{0}', space=vmem, size = 0x1000, scoped, tag = 'input window, operand 0, single buffered']
    #allocation3 [shape = 's32[1]{0}', space=sflag, size = 0x4, scoped, tag = 'scoped memory for tpu_custom_call.1']
    #allocation4 [shape = 's32[1]{0}', space=sflag, size = 0x4, scoped, tag = 'scoped memory for tpu_custom_call.1']
    #allocation5 [shape = 'u8[65536]{0}', space=vmem, size = 0x10000, scoped, tag = 'input window, operand 1, single buffered']
    #allocation6 [shape = 's32[1]{0}', space=sflag, size = 0x4, scoped, tag = 'scoped memory for tpu_custom_call.1']
    #allocation7 [shape = 'u8[4096]{0}', space=vmem, size = 0x1000, scoped, tag = 'output window, operand 0, single buffered']
    %8 = vsyncpa [#allocation3], 0
    %9 = vsyncpa [#allocation6], 0
    %10 = vsyncpa [#allocation4], 0
    // Predicated region
    $region2: #{tpu_custom_call.1} parent=1 // pred_check
      _
    $region3: #{tpu_custom_call.1} parent=1 // pred_check_branch
      %12 = sbr.rel (0) target = $region5
    $region4: #{tpu_custom_call.1} parent=1 // pred_region
      %14 = vsyncadd [#allocation3], 0
      %s16 = sshll.u32 %s0, 4
      %s17 = int_to_ptr.hbm [resolvable:$true] %s16
      %s18 = sshll.u32 [#allocation2], 4
      %s19 = int_to_ptr.vmem [resolvable:$true] %s18
      %21 = dma.hbm_to_vmem [thread:$0]  %s17, 128, %s19, [#allocation3]
    $region5: #{tpu_custom_call.1} parent=1 // pred_fallthru
      _
    // Predicated region
    $region6: #{tpu_custom_call.1} parent=1 // pred_check
      _
    $region7: #{tpu_custom_call.1} parent=1 // pred_check_branch
      %23 = sbr.rel (0) target = $region9
    $region8: #{tpu_custom_call.1} parent=1 // pred_region
      %25 = vsyncadd [#allocation6], 0
      %s26 = sshll.u32 %s1, 4
      %s27 = int_to_ptr.hbm [resolvable:$true] %s26
      %s28 = sshll.u32 [#allocation5], 4
      %s29 = int_to_ptr.vmem [resolvable:$true] %s28
      %34 = dma.hbm_to_vmem [thread:$0]  %s27, 2048, %s29, [#allocation6], 128, 128, 8
    $region9: #{tpu_custom_call.1} parent=1 // pred_fallthru
      _
    // Predicated region
    $region10: #{tpu_custom_call.1} parent=1 // pred_check
      _
    $region11: #{tpu_custom_call.1} parent=1 // pred_check_branch
      %36 = sbr.rel (0) target = $region13
    $region12: #{tpu_custom_call.1} parent=1 // pred_region
      _
    $region13: #{tpu_custom_call.1} parent=1 // pred_fallthru
      _
    // Predicated region
    $region14: #{tpu_custom_call.1} parent=1 // pred_check
      _
    $region15: #{tpu_custom_call.1} parent=1 // pred_check_branch
      %38 = sbr.rel (0) target = $region17
    $region16: #{tpu_custom_call.1} parent=1 // pred_region
      %40 = dma.done [#allocation3], 128
    $region17: #{tpu_custom_call.1} parent=1 // pred_fallthru
      _
    // Predicated region
    $region18: #{tpu_custom_call.1} parent=1 // pred_check
      _
    $region19: #{tpu_custom_call.1} parent=1 // pred_check_branch
      %42 = sbr.rel (0) target = $region21
    $region20: #{tpu_custom_call.1} parent=1 // pred_region
      %44 = dma.done [#allocation6], 2048
    $region21: #{tpu_custom_call.1} parent=1 // pred_fallthru
      _
    %v45 = vld [vmem:[#allocation5] sm:$0xff]
    %v46 = vld [vmem:[#allocation5 + $0x8] sm:$0xff]
    %v47 = vld [vmem:[#allocation5 + $0x10] sm:$0xff]
    %v48 = vld [vmem:[#allocation5 + $0x18] sm:$0xff]
    %v49 = vld [vmem:[#allocation5 + $0x20] sm:$0xff]
    %v50 = vld [vmem:[#allocation5 + $0x28] sm:$0xff]
    %v51 = vld [vmem:[#allocation5 + $0x30] sm:$0xff]
    %v52 = vld [vmem:[#allocation5 + $0x38] sm:$0xff]
    %v53 = vld [vmem:[#allocation5 + $0x40] sm:$0xff]
    %v54 = vld [vmem:[#allocation5 + $0x48] sm:$0xff]
    %v55 = vld [vmem:[#allocation5 + $0x50] sm:$0xff]
    %v56 = vld [vmem:[#allocation5 + $0x58] sm:$0xff]
    %v57 = vld [vmem:[#allocation5 + $0x60] sm:$0xff]
    %v58 = vld [vmem:[#allocation5 + $0x68] sm:$0xff]
    %v59 = vld [vmem:[#allocation5 + $0x70] sm:$0xff]
    %v60 = vld [vmem:[#allocation5 + $0x78] sm:$0xff]
    %v61 = vld [vmem:[%s2] sm:$0x1]
    %v62 = vld [vmem:[#allocation2] sm:$0xff]
    %v64 = vperm.slane %v61, 0
    %66 = vmatpush.msra.mxu0 %v60
    %67 = vmatpush.msra.mxu0 %v59
    %68 = vmatpush.msra.mxu0 %v58
    %69 = vmatpush.msra.mxu0 %v57
    %70 = vmatpush.msra.mxu0 %v56
    %71 = vmatpush.msra.mxu0 %v55
    %72 = vmatpush.msra.mxu0 %v54
    %73 = vmatpush.msra.mxu0 %v53
    %74 = vmatpush.msra.mxu0 %v52
    %75 = vmatpush.msra.mxu0 %v51
    %76 = vmatpush.msra.mxu0 %v50
    %77 = vmatpush.msra.mxu0 %v49
    %78 = vmatpush.msra.mxu0 %v48
    %79 = vmatpush.msra.mxu0 %v47
    %80 = vmatpush.msra.mxu0 %v46
    %81 = vmatpush.msra.mxu0 %v45
    %82 = vmatmul.f32.gmra.mxu0 %v62
    %v83 = vpop.f32.mrf.mxu0
    %v84 = vadd.f32 %v64, %v83
    %85 = vdwg.mxu0
    %86 = vmatpush.msra.mxu0 %v60
    %87 = vmatpush.msra.mxu0 %v59
    %88 = vmatpush.msra.mxu0 %v58
    %89 = vmatpush.msra.mxu0 %v57
    %90 = vmatpush.msra.mxu0 %v56
    %91 = vmatpush.msra.mxu0 %v55
    %92 = vmatpush.msra.mxu0 %v54
    %93 = vmatpush.msra.mxu0 %v53
    %94 = vmatpush.msra.mxu0 %v52
    %95 = vmatpush.msra.mxu0 %v51
    %96 = vmatpush.msra.mxu0 %v50
    %97 = vmatpush.msra.mxu0 %v49
    %98 = vmatpush.msra.mxu0 %v48
    %99 = vmatpush.msra.mxu0 %v47
    %100 = vmatpush.msra.mxu0 %v46
    %101 = vmatpush.msra.mxu0 %v45
    %102 = vmatmul.f32.gmra.mxu0 %v84
    %v103 = vpop.f32.mrf.mxu0
    %v104 = vadd.f32 %v64, %v103
    %105 = vdwg.mxu0
    %106 = vmatpush.msra.mxu0 %v60
    %107 = vmatpush.msra.mxu0 %v59
    %108 = vmatpush.msra.mxu0 %v58
    %109 = vmatpush.msra.mxu0 %v57
    %110 = vmatpush.msra.mxu0 %v56
    %111 = vmatpush.msra.mxu0 %v55
    %112 = vmatpush.msra.mxu0 %v54
    %113 = vmatpush.msra.mxu0 %v53
    %114 = vmatpush.msra.mxu0 %v52
    %115 = vmatpush.msra.mxu0 %v51
    %116 = vmatpush.msra.mxu0 %v50
    %117 = vmatpush.msra.mxu0 %v49
    %118 = vmatpush.msra.mxu0 %v48
    %119 = vmatpush.msra.mxu0 %v47
    %120 = vmatpush.msra.mxu0 %v46
    %121 = vmatpush.msra.mxu0 %v45
    %122 = vmatmul.f32.gmra.mxu0 %v104
    %v123 = vpop.f32.mrf.mxu0
    %v124 = vadd.f32 %v64, %v123
    %125 = vdwg.mxu0
    %126 = vst [vmem:[#allocation7] sm:$0xff] %v124
    // Predicated region
    $region22: #{tpu_custom_call.1} parent=1 // pred_check
      _
    $region23: #{tpu_custom_call.1} parent=1 // pred_check_branch
      %128 = sbr.rel (0) target = $region25
    $region24: #{tpu_custom_call.1} parent=1 // pred_region
      %130 = vsyncadd [#allocation4], 0
      %s132 = sshll.u32 [#allocation7], 4
      %s133 = int_to_ptr.vmem [resolvable:$true] %s132
      %s134 = sshll.u32 %s3, 4
      %s135 = int_to_ptr.hbm [resolvable:$true] %s134
      %137 = dma.vmem_to_hbm [thread:$0]  %s133, 128, %s135, [#allocation4]
    $region25: #{tpu_custom_call.1} parent=1 // pred_fallthru
      _
    // Predicated region
    $region26: #{tpu_custom_call.1} parent=1 // pred_check
      _
    $region27: #{tpu_custom_call.1} parent=1 // pred_check_branch
      %139 = sbr.rel (0) target = $region29
    $region28: #{tpu_custom_call.1} parent=1 // pred_region
      %141 = dma.done [#allocation4], 128
    $region29: #{tpu_custom_call.1} parent=1 // pred_fallthru
      _
    %142 = vsyncpa [#allocation3], 1
    %143 = vsyncpa [#allocation6], 1
    %144 = vsyncpa [#allocation4], 1

</llo_original>
